<compile_context>
chip_gen: v6e
topology: v6e:2x2x1
jax: 0.10.0
libtpu: 0.0.40
codegen_flags: <defaults>
</compile_context>

<pallas_src>
import functools

import jax
import jax.numpy as jnp
from jax import lax
from jax.experimental import pallas as pl
from jax.experimental.pallas import tpu as pltpu

_LANES = 128


# ----------------------------------------------------------------------------
# Helpers
# ----------------------------------------------------------------------------
def _layernorm(x, g, b, eps=1e-5):
    mu = jnp.mean(x, axis=-1, keepdims=True)
    var = jnp.mean(jnp.square(x - mu), axis=-1, keepdims=True)
    return (x - mu) * lax.rsqrt(var + eps) * g + b


# One-time probe that pins down the pltpu.roll rotation convention so the
# segmented scan shifts are always in the intended direction.
_ROLL_NUMPY = None


def _roll_probe_kernel(x_ref, o_ref):
    o_ref[...] = pltpu.roll(x_ref[...], 1, 0)


def _roll_matches_numpy():
    """True iff pltpu.roll(x, s, 0)[i] == x[i - s] (np.roll convention)."""
    global _ROLL_NUMPY
    if _ROLL_NUMPY is None:
        x = lax.broadcasted_iota(jnp.float32, (8, _LANES), 0)
        y = pl.pallas_call(
            _roll_probe_kernel,
            out_shape=jax.ShapeDtypeStruct((8, _LANES), jnp.float32))(x)
        _ROLL_NUMPY = bool(y[1, 0] == 0.0)
    return _ROLL_NUMPY


# ----------------------------------------------------------------------------
# Fused kernel: all (BidirectionalMamba + MoE) blocks on a VMEM-resident T
# ----------------------------------------------------------------------------
def _fused_kernel(BT, Tn_real, Tn_pad, E, F, NE, TOPK, OFFS, ROLL_NP,
                  t0_ref, w_in_ref, w_out_ref, w_gate_ref, w1_ref, w2_ref,
                  pk_ref, out_ref):
    R = BT * Tn_pad
    D = out_ref.shape[-1]
    bf16 = jnp.bfloat16

    # Block 0 seeds the VMEM-resident flat token tensor T (already embedded in
    # the wrapper); it then persists in the output block across the block axis.
    @pl.when(pl.program_id(1) == 0)
    def _init():
        out_ref[...] = t0_ref[...]

    # Unpack the single per-block buffer of small parameters (one DMA instead
    # of 11 tiny ones).  Everything is stored as rows of 128 f32 lanes.
    pk = pk_ref[0]

    def take(name, shape):
        off, nrows = OFFS[name]
        return pk[off:off + nrows, :].reshape(shape)

    ln1_g = take("ln1_g", (1, D))
    ln1_b = take("ln1_b", (1, D))
    b_in_x = take("b_in_x", (1, E))
    b_in_z = take("b_in_z", (1, E))
    a_f = take("a_fwd", (1, E))
    a_b = take("a_bwd", (1, E))
    b_out = take("b_out", (1, D))
    ln2_g = take("ln2_g", (1, D))
    ln2_b = take("ln2_b", (1, D))
    b1 = take("b1", (NE, F))
    b2 = take("b2", (NE, D))

    x = out_ref[...]                                      # (R, D) f32, resident

    # ---- BidirectionalMamba (simplified): LN -> in-proj -> fwd/bwd gated
    # linear recurrence (segmented log-time scan) -> SiLU gate -> out-proj.
    xn = _layernorm(x, ln1_g, ln1_b)
    xz = jnp.dot(xn.astype(bf16), w_in_ref[0],
                 preferred_element_type=jnp.float32)      # (R, 2E)

    pos = lax.broadcasted_iota(jnp.int32, (R, 1), 0) % Tn_pad
    valid = pos < Tn_real                                 # padded rows get no SSM input
    xin = jnp.where(valid, xz[:, :E] + b_in_x, 0.0)
    z = xz[:, E:] + b_in_z

    af = jax.nn.sigmoid(a_f)                              # (1, E) decay
    ab = jax.nn.sigmoid(a_b)
    hf = (1.0 - af) * xin
    hb = (1.0 - ab) * xin

    # Segmented (per sequence) Hillis-Steele scan  h_t = a*h_{t±1} + (1-a)*x_t
    # in log2(Tn_pad) full-tile steps.  Shifts use the XLU roll slot; a^d is
    # built by iterative squaring on the VPU.  The pos masks keep every pull
    # inside its own sequence and away from padding rows.
    af_d, ab_d = af, ab
    d = 1
    while d < Tn_pad:                                     # static unroll
        sf, sb = (d, R - d) if ROLL_NP else (R - d, d)
        prev = pltpu.roll(hf, sf, 0)                      # prev[i] = hf[i - d]
        nxt = pltpu.roll(hb, sb, 0)                       # nxt[i]  = hb[i + d]
        hf = hf + af_d * jnp.where(pos >= d, prev, 0.0)
        hb = hb + ab_d * jnp.where(pos < Tn_real - d, nxt, 0.0)
        af_d = af_d * af_d
        ab_d = ab_d * ab_d
        d *= 2

    y = (hf + hb) * (z * jax.nn.sigmoid(z))               # SiLU gate
    t1 = x + jnp.dot(y.astype(bf16), w_out_ref[0],
                     preferred_element_type=jnp.float32) + b_out

    # ---- MoE: LN -> top-k softmax routing -> experts.  Gate is applied on the
    # VPU to per-expert (R, D) outputs; no gate-expansion matmuls.
    tn = _layernorm(t1, ln2_g, ln2_b)
    tn_b = tn.astype(bf16)                                # reused by gate + experts
    logits = jnp.dot(tn_b, w_gate_ref[0],
                     preferred_element_type=jnp.float32)  # (R, NE)

    remaining = logits
    kth = None
    for _ in range(TOPK):                                 # k-th largest via max-masking
        kth = jnp.max(remaining, axis=-1, keepdims=True)
        remaining = jnp.where(remaining >= kth, -1e30, remaining)
    # TODO(synk): ties at the k-th logit route to >TOPK experts (weights still
    # normalized); torch.topk breaks ties by index instead.
    masked = jnp.where(logits >= kth, logits, -1e30)
    m = jnp.max(masked, axis=-1, keepdims=True)
    ew = jnp.exp(masked - m)
    gw = ew / jnp.sum(ew, axis=-1, keepdims=True)         # (R, NE)

    h_raw = jnp.dot(tn_b, w1_ref[0],
                    preferred_element_type=jnp.float32)   # (R, NE*F), one wide matmul
    w2 = w2_ref[0]                                        # (NE*F, D) bf16
    moe = None
    for e in range(NE):                                   # static unroll over experts
        he = jax.nn.gelu(h_raw[:, e * F:(e + 1) * F] + b1[e:e + 1, :])
        oe = jnp.dot(he.astype(bf16), w2[e * F:(e + 1) * F, :],
                     preferred_element_type=jnp.float32) + b2[e:e + 1, :]
        term = gw[:, e:e + 1] * oe                        # VPU gating
        moe = term if moe is None else moe + term

    out_ref[...] = t1 + moe


# ----------------------------------------------------------------------------
# Packing of small per-block parameters into one (NB, rows, 128) f32 buffer
# ----------------------------------------------------------------------------
def _pack_block_params(bw, D, E, F, NE):
    NB = bw["w_in"].shape[0]
    entries = [
        ("ln1_g", bw["ln1_g"], D), ("ln1_b", bw["ln1_b"], D),
        ("b_in_x", bw["b_in"][..., :E], E), ("b_in_z", bw["b_in"][..., E:], E),
        ("a_fwd", bw["a_fwd"], E), ("a_bwd", bw["a_bwd"], E),
        ("b_out", bw["b_out"], D),
        ("ln2_g", bw["ln2_g"], D), ("ln2_b", bw["ln2_b"], D),
        ("b1", bw["b1"], NE * F), ("b2", bw["b2"], NE * D),
    ]
    offs, rows, off = {}, [], 0
    for name, arr, width in entries:
        assert width % _LANES == 0
        nrows = width // _LANES
        rows.append(jnp.asarray(arr, jnp.float32).reshape(NB, nrows, _LANES))
        offs[name] = (off, nrows)
        off += nrows
    packed = jnp.concatenate(rows, axis=1)
    pad = (-off) % 8                                      # sublane-align the buffer
    if pad:
        packed = jnp.pad(packed, ((0, 0), (0, pad), (0, 0)))
    return packed, offs


# ----------------------------------------------------------------------------
# Wrapper
# ----------------------------------------------------------------------------
def eeg_mamba_forward(x, params, batch_tile=None):
    B, C, L = x.shape
    P, D, E, F = params["patch"], params["D"], params["E"], params["F"]
    NE, TOPK, NB = params["num_experts"], params["topk"], params["num_blocks"]
    assert L % P == 0 and 1 <= TOPK <= NE
    assert D % _LANES == 0 and E % _LANES == 0 and F % _LANES == 0
    N = L // P
    Tn_real = N + 1
    Tn_pad = max(8, -(-Tn_real // 8) * 8)                 # sublane-aligned token axis

    if batch_tile is None:
        # R = batch_tile * Tn_pad in the 128-512 range fills the MXU M dim and
        # amortizes per-step / DMA overhead; keep >= 2 batch tiles so the
        # "parallel" axis can shard across both v7x TensorCores.
        bt = min(B, max(1, 512 // Tn_pad))
        while B % bt:
            bt -= 1
        if B // bt < 2 and bt % 2 == 0:
            bt //= 2
        batch_tile = bt
    assert B % batch_tile == 0
    BT = batch_tile
    NBT = B // BT
    R = BT * Tn_pad

    # ---- STAdaptive: patch embedding + class token.  K = C*P is tiny and
    # lane-sparse, so this one-off matmul is left to XLA; the kernel only ever
    # sees the embedded, padded, flat token tensor.
    xp = x.reshape(B, C, N, P).transpose(0, 2, 1, 3).reshape(B * N, C * P)
    tok = (jnp.dot(xp.astype(jnp.bfloat16), params["w_embed"],
                   preferred_element_type=jnp.float32)
           + params["b_embed"]).reshape(B, N, D)
    cls = jnp.broadcast_to(params["cls_token"][None].astype(jnp.float32),
                           (B, 1, D))
    t0 = jnp.concatenate([cls, tok], axis=1)              # (B, Tn_real, D)
    t0 = jnp.pad(t0, ((0, 0), (0, Tn_pad - Tn_real), (0, 0)))
    t0 = t0.reshape(B * Tn_pad, D)                        # flat, lane/sublane dense

    bw = params["blocks"]
    packed, offs = _pack_block_params(bw, D, E, F, NE)

    kern = functools.partial(_fused_kernel, BT, Tn_real, Tn_pad, E, F, NE,
                             TOPK, offs, _roll_matches_numpy())

    def stacked(a):                                       # per-block slice, lead axis
        return pl.BlockSpec((1,) + a.shape[1:],
                            lambda g, i: (i,) + (0,) * (a.ndim - 1))

    try:                                                  # size VMEM to the chip
        vmem_cap = pltpu.get_tpu_info().vmem_capacity_bytes
    except Exception:
        vmem_cap = 64 * 1024 * 1024
    vmem_limit = int(max(32 * 1024 * 1024,
                         min(vmem_cap * 3 // 4, 100 * 1024 * 1024)))

    T = pl.pallas_call(
        kern,
        grid=(NBT, NB),
        in_specs=[
            pl.BlockSpec((R, D), lambda g, i: (g, 0)),    # t0: one DMA per tile
            stacked(bw["w_in"]), stacked(bw["w_out"]), stacked(bw["w_gate"]),
            stacked(bw["w1"]), stacked(bw["w2"]), stacked(packed),
        ],
        out_specs=pl.BlockSpec((R, D), lambda g, i: (g, 0)),  # VMEM-resident T
        out_shape=jax.ShapeDtypeStruct((B * Tn_pad, D), jnp.float32),
        compiler_params=pltpu.CompilerParams(
            dimension_semantics=("parallel", "arbitrary"),
            vmem_limit_bytes=vmem_limit),
    )(t0, bw["w_in"], bw["w_out"], bw["w_gate"], bw["w1"], bw["w2"], packed)

    # Classifier on the class token: tiny matmul — defer to XLA.
    cls_tok = T.reshape(B, Tn_pad, D)[:, 0, :]
    return jnp.dot(cls_tok, params["w_cls"]) + params["b_cls"]


# ----------------------------------------------------------------------------
# Pure-JAX reference (same simplified sub-module math, no padding, serial scan)
# ----------------------------------------------------------------------------
def reference_forward(x, params):
    B, C, L = x.shape
    P, D, E, F = params["patch"], params["D"], params["E"], params["F"]
    NE, K, NB = params["num_experts"], params["topk"], params["num_blocks"]
    N = L // P
    Tn = N + 1
    bf16 = jnp.bfloat16

    xp = x.reshape(B, C, N, P).transpose(0, 2, 1, 3).reshape(B * N, C * P)
    tok = (jnp.dot(xp.astype(bf16), params["w_embed"],
                   preferred_element_type=jnp.float32)
           + params["b_embed"]).reshape(B, N, D)
    cls = jnp.broadcast_to(params["cls_token"][None].astype(jnp.float32),
                           (B, 1, D))
    T = jnp.concatenate([cls, tok], axis=1)
    bw = params["blocks"]

    for i in range(NB):
        xn = _layernorm(T, bw["ln1_g"][i], bw["ln1_b"][i])
        xz = jnp.dot(xn.astype(bf16), bw["w_in"][i],
                     preferred_element_type=jnp.float32) + bw["b_in"][i]
        xin, z = xz[..., :E], xz[..., E:]
        af = jax.nn.sigmoid(bw["a_fwd"][i])
        ab = jax.nn.sigmoid(bw["a_bwd"][i])
        bfv = (1.0 - af) * xin
        bbv = (1.0 - ab) * xin
        hf = []
        h = jnp.zeros((B, E), jnp.float32)
        for t in range(Tn):
            h = af * h + bfv[:, t]
            hf.append(h)
        hf = jnp.stack(hf, axis=1)
        hb = [None] * Tn
        h = jnp.zeros((B, E), jnp.float32)
        for t in reversed(range(Tn)):
            h = ab * h + bbv[:, t]
            hb[t] = h
        hb = jnp.stack(hb, axis=1)
        y = (hf + hb) * (z * jax.nn.sigmoid(z))
        t1 = T + jnp.dot(y.astype(bf16), bw["w_out"][i],
                         preferred_element_type=jnp.float32) + bw["b_out"][i]

        tn = _layernorm(t1, bw["ln2_g"][i], bw["ln2_b"][i])
        tnb = tn.astype(bf16)
        logits = jnp.dot(tnb, bw["w_gate"][i], preferred_element_type=jnp.float32)
        remaining = logits
        kth = None
        for _ in range(K):
            kth = jnp.max(remaining, axis=-1, keepdims=True)
            remaining = jnp.where(remaining >= kth, -1e30, remaining)
        masked = jnp.where(logits >= kth, logits, -1e30)
        m = jnp.max(masked, axis=-1, keepdims=True)
        ew = jnp.exp(masked - m)
        gw = ew / jnp.sum(ew, axis=-1, keepdims=True)
        h_raw = jnp.dot(tnb, bw["w1"][i], preferred_element_type=jnp.float32)
        acc = jnp.zeros_like(t1)
        for e in range(NE):
            he = jax.nn.gelu(h_raw[..., e * F:(e + 1) * F]
                             + bw["b1"][i][0, e * F:(e + 1) * F])
            oe = jnp.dot(he.astype(bf16), bw["w2"][i, e * F:(e + 1) * F, :],
                         preferred_element_type=jnp.float32) + bw["b2"][i, e]
            acc = acc + gw[..., e:e + 1] * oe
        T = t1 + acc

    return jnp.dot(T[:, 0, :], params["w_cls"]) + params["b_cls"]


# ----------------------------------------------------------------------------
# Deterministic synthetic parameters (per-block weights stacked on a lead axis)
# ----------------------------------------------------------------------------
def init_params(key, C, D, E, F, NE, topk, num_blocks, num_class, patch):
    ks = jax.random.split(key, 20)
    bf16 = jnp.bfloat16

    def nrm(k, shape, scale=0.02, dtype=jnp.float32):
        return (scale * jax.random.normal(k, shape)).astype(dtype)

    p = dict(patch=patch, D=D, E=E, F=F, num_experts=NE, topk=topk,
             num_class=num_class, num_blocks=num_blocks)
    p["w_embed"] = nrm(ks[0], (C * patch, D), dtype=bf16)
    p["b_embed"] = nrm(ks[1], (1, D))
    p["cls_token"] = nrm(ks[2], (1, D))
    p["w_cls"] = nrm(ks[3], (D, num_class))
    p["b_cls"] = jnp.zeros((num_class,), jnp.float32)

    NB = num_blocks
    p["blocks"] = dict(
        ln1_g=jnp.ones((NB, 1, D), jnp.float32),
        ln1_b=nrm(ks[4], (NB, 1, D)),
        w_in=nrm(ks[5], (NB, D, 2 * E), dtype=bf16),
        b_in=nrm(ks[6], (NB, 1, 2 * E)),
        a_fwd=nrm(ks[7], (NB, 1, E), 1.0),
        a_bwd=nrm(ks[8], (NB, 1, E), 1.0),
        w_out=nrm(ks[9], (NB, E, D), dtype=bf16),
        b_out=nrm(ks[10], (NB, 1, D)),
        ln2_g=jnp.ones((NB, 1, D), jnp.float32),
        ln2_b=nrm(ks[11], (NB, 1, D)),
        w_gate=nrm(ks[12], (NB, D, NE), dtype=bf16),
        w1=nrm(ks[13], (NB, D, NE * F), dtype=bf16),     # experts fused on lanes
        b1=nrm(ks[14], (NB, 1, NE * F)),
        w2=nrm(ks[15], (NB, NE * F, D), dtype=bf16),     # experts fused on rows
        b2=nrm(ks[16], (NB, NE, D)),
    )
    return p


# ----------------------------------------------------------------------------
if __name__ == "__main__":
    key = jax.random.PRNGKey(0)
    kx, kp = jax.random.split(key)

    # Small, forward-consistent shapes (lane-dense hidden dim).
    B, C, L = 16, 4, 32           # (batch, roi channels, signal length)
    D, E, F = 128, 128, 128       # hidden dim, mamba inner dim, expert hidden dim
    NE, TOPK = 4, 2               # num_experts, topk
    num_blocks, num_class, patch = 2, 3, 4

    x = jax.random.normal(kx, (B, C, L), dtype=jnp.float32)
    params = init_params(kp, C, D, E, F, NE, TOPK, num_blocks, num_class, patch)

    out = eeg_mamba_forward(x, params, batch_tile=8)   # R = 8*16 = 128, 2 tiles
    jax.block_until_ready(out)

    assert out.shape == (B, num_class)
    assert bool(jnp.all(jnp.isfinite(out)))
    ref = reference_forward(x, params)
    assert bool(jnp.allclose(out, ref, rtol=5e-2, atol=3e-3))
    print("KERNEL_OK")
</pallas_src>

<mosaic_0001>
module attributes {stable_mosaic.version = 11 : i64} {
  func.func @_roll_probe_kernel(%arg0: memref<8x128xf32, #tpu.memory_space<vmem>>, %arg1: memref<8x128xf32, #tpu.memory_space<vmem>>) attributes {dimension_semantics = [], scalar_prefetch = 0 : i64, scratch_operands = 0 : i64, tpu.core_type = #tpu.core_type<tc>} {
    %c0 = arith.constant 0 : index
    %c0_0 = arith.constant 0 : index
    %0 = vector.load %arg0[%c0, %c0_0] : memref<8x128xf32, #tpu.memory_space<vmem>>, vector<8x128xf32>
    %c1_i32 = arith.constant 1 : i32
    %1 = tpu.dynamic_rotate %0 by %c1_i32 dim 0 : vector<8x128xf32>, i32 -> vector<8x128xf32>
    %c0_1 = arith.constant 0 : index
    %c0_2 = arith.constant 0 : index
    %2 = vector.load %arg1[%c0_1, %c0_2] : memref<8x128xf32, #tpu.memory_space<vmem>>, vector<8x128xf32>
    tpu.vector_store %arg1[%c0_1, %c0_2], %1 {strides = array<i32>} : memref<8x128xf32, #tpu.memory_space<vmem>>, vector<8x128xf32>,
    return
  }
}

</mosaic_0001>

<llo_original>
// kernel: tpu_custom_call.1
$region0: #{tpu_custom_call.1}
  #allocation0 [shape = 'u32[]', space=smem, size = 0x4, offset = 0x4, fixed_abs, tag = 'smem constant byte address 0x4 - core index']
  #allocation1 [shape = 'u32[144,128]{1,0:T(1,128)}', space=vmem, size = 0x12000, scoped, tag = 'internal scratch']
  %s0 = inlined_call_operand.hbm [shape: f32[8,128], index: 0, kind: input, shape index: {}]
  %s1 = inlined_call_operand.hbm [shape: f32[8,128], index: 1, kind: output, shape index: {}]
  %s2 = sld [smem:[#allocation0]]
  $region18: #{tpu_custom_call.1} parent=0
    _
  %s4 = ssub.s32 1, %s2
  %s5 = scalar_select 0, %s4, %s2
  $region1: #{tpu_custom_call.1} parent=0
    #allocation2 [shape = 'u8[4096]{0}', space=vmem, size = 0x1000, scoped, tag = 'input window, operand 0, single buffered']
    #allocation3 [shape = 's32[1]{0}', space=sflag, size = 0x4, scoped, tag = 'scoped memory for tpu_custom_call.1']
    #allocation4 [shape = 's32[1]{0}', space=sflag, size = 0x4, scoped, tag = 'scoped memory for tpu_custom_call.1']
    #allocation5 [shape = 'u8[4096]{0}', space=vmem, size = 0x1000, scoped, tag = 'output window, operand 0, single buffered']
    %6 = vsyncpa [#allocation3], 0
    %7 = vsyncpa [#allocation4], 0
    // Predicated region
    $region2: #{tpu_custom_call.1} parent=1 // pred_check
      _
    $region3: #{tpu_custom_call.1} parent=1 // pred_check_branch
      %9 = sbr.rel (0) target = $region5
    $region4: #{tpu_custom_call.1} parent=1 // pred_region
      %s11 = ssub.s32 128, 128
      %12 = vsyncadd [#allocation3], %s11
      %s14 = sshll.u32 [#allocation2], 4
      %s15 = int_to_ptr.vmem [resolvable:$true] %s14
      %17 = dma.hbm_to_vmem [thread:$0]  %s0, 128, %s15, [#allocation3]
    $region5: #{tpu_custom_call.1} parent=1 // pred_fallthru
      _
    // Predicated region
    $region6: #{tpu_custom_call.1} parent=1 // pred_check
      _
    $region7: #{tpu_custom_call.1} parent=1 // pred_check_branch
      %19 = sbr.rel (0) target = $region9
    $region8: #{tpu_custom_call.1} parent=1 // pred_region
      %20 = dma.done [#allocation3], 128
    $region9: #{tpu_custom_call.1} parent=1 // pred_fallthru
      _
    %v21 = vld [vmem:[#allocation2] sm:$0xff]
    %v22 = vrot.slane %v21, 7
    %23 = vst [vmem:[#allocation5] sm:$0xff] %v22
    // Predicated region
    $region10: #{tpu_custom_call.1} parent=1 // pred_check
      _
    $region11: #{tpu_custom_call.1} parent=1 // pred_check_branch
      %25 = sbr.rel (0) target = $region13
    $region12: #{tpu_custom_call.1} parent=1 // pred_region
      %s27 = ssub.s32 128, 128
      %28 = vsyncadd [#allocation4], %s27
      %s30 = sshll.u32 [#allocation5], 4
      %s31 = int_to_ptr.vmem [resolvable:$true] %s30
      %33 = dma.vmem_to_hbm [thread:$0]  %s31, 128, %s1, [#allocation4]
    $region13: #{tpu_custom_call.1} parent=1 // pred_fallthru
      _
    // Predicated region
    $region14: #{tpu_custom_call.1} parent=1 // pred_check
      _
    $region15: #{tpu_custom_call.1} parent=1 // pred_check_branch
      %35 = sbr.rel (0) target = $region17
    $region16: #{tpu_custom_call.1} parent=1 // pred_region
      %36 = dma.done [#allocation4], 128
    $region17: #{tpu_custom_call.1} parent=1 // pred_fallthru
      _
    %37 = vsyncpa [#allocation3], 1
    %38 = vsyncpa [#allocation4], 1

</llo_original>
